<compile_context>
chip_gen: v7x
topology: tpu7x:2x2x1
jax: 0.10.0
libtpu: 0.0.40
codegen_flags: <defaults>
</compile_context>

<pallas_src>
import functools
import math

import jax
import jax.numpy as jnp
import numpy as np
from jax import lax
from jax.experimental import pallas as pl
from jax.experimental.pallas import tpu as pltpu  # noqa: F401  (TPU backend)


def _posenc_kernel(pos_ref, out_ref):
    """pos_ref: (B, 1) f32 in VMEM; out_ref: (B, D) f32 in VMEM, D even."""
    D = out_ref.shape[-1]
    count = D // 2

    # step = arange(count) / count, built as a lane-axis iota (2-D as TPU requires).
    step = lax.broadcasted_iota(jnp.int32, (1, count), 1).astype(jnp.float32)
    step = step * (1.0 / count)

    # freq = exp(-ln(10000) * step)  -> EUP transcendental, (1, count) on lanes.
    freq = jnp.exp(step * (-math.log(10000.0)))

    # angles: (B, 1) * (1, count) -> (B, count); broadcast along lanes.
    angles = pos_ref[...] * freq

    # Lane-dense single store: both halves are 128-lane aligned when count=128.
    out_ref[...] = jnp.concatenate([jnp.sin(angles), jnp.cos(angles)], axis=-1)


@functools.partial(jax.jit, static_argnames=("embedding_dim",))
def positional_encoding_pallas(position_level, embedding_dim):
    """position_level: (B,) array of time / noise-variance values."""
    B = position_level.shape[0]
    pos2d = position_level.reshape(B, 1).astype(jnp.float32)  # free reshape
    return pl.pallas_call(
        _posenc_kernel,
        out_shape=jax.ShapeDtypeStruct((B, embedding_dim), jnp.float32),
    )(pos2d)


def positional_encoding_reference(position_level, embedding_dim):
    """Pure-JAX reference of the PyTorch forward (for validation)."""
    count = embedding_dim // 2
    step = jnp.arange(count, dtype=jnp.float32) / count
    enc = position_level.astype(jnp.float32)[:, None] * jnp.exp(
        -math.log(10000.0) * step[None, :])
    return jnp.concatenate([jnp.sin(enc), jnp.cos(enc)], axis=-1)


if __name__ == "__main__":
    B = 8                 # batch of time/noise values (one vreg's 8 sublanes)
    EMBEDDING_DIM = 256   # -> count = 128, lane-dense output (multiple of 128)

    key = jax.random.PRNGKey(0)
    # time / noise-variance style inputs
    position_level = jax.random.uniform(key, (B,), jnp.float32) * 10.0

    out = positional_encoding_pallas(position_level, EMBEDDING_DIM)
    out = jax.block_until_ready(out)

    ref = jax.block_until_ready(
        positional_encoding_reference(position_level, EMBEDDING_DIM))
    np.testing.assert_allclose(np.asarray(out), np.asarray(ref),
                               rtol=1e-4, atol=1e-4)
    assert out.shape == (B, EMBEDDING_DIM)
    print("KERNEL_OK")
</pallas_src>

<mosaic_0001>
module attributes {stable_mosaic.version = 11 : i64} {
  func.func @_posenc_kernel(%arg0: memref<8x1xf32, #tpu.memory_space<vmem>>, %arg1: memref<8x256xf32, #tpu.memory_space<vmem>>) attributes {dimension_semantics = [], scalar_prefetch = 0 : i64, scratch_operands = 0 : i64, tpu.core_type = #tpu.core_type<tc>} {
    %0 = tpu.iota {dimensions = array<i32: 1>} : vector<1x128xi32>
    %1 = arith.sitofp %0 : vector<1x128xi32> to vector<1x128xf32>
    %cst = arith.constant 7.812500e-03 : f32
    %2 = vector.broadcast %cst : f32 to vector<1x128xf32>
    %3 = arith.mulf %1, %2 : vector<1x128xf32>
    %cst_0 = arith.constant -9.21034049 : f32
    %4 = vector.broadcast %cst_0 : f32 to vector<1x128xf32>
    %5 = arith.mulf %3, %4 : vector<1x128xf32>
    %6 = math.exp %5 : vector<1x128xf32>
    %c0 = arith.constant 0 : index
    %c0_1 = arith.constant 0 : index
    %7 = vector.load %arg0[%c0, %c0_1] : memref<8x1xf32, #tpu.memory_space<vmem>>, vector<8x1xf32>
    %8 = vector.broadcast %7 : vector<8x1xf32> to vector<8x128xf32>
    %9 = vector.broadcast %6 : vector<1x128xf32> to vector<8x128xf32>
    %10 = arith.mulf %8, %9 : vector<8x128xf32>
    %11 = math.sin %10 : vector<8x128xf32>
    %12 = math.cos %10 : vector<8x128xf32>
    %13 = tpu.concatenate %11, %12 in 1 : vector<8x128xf32>, vector<8x128xf32> -> vector<8x256xf32>
    %c0_2 = arith.constant 0 : index
    %c0_3 = arith.constant 0 : index
    %14 = vector.load %arg1[%c0_2, %c0_3] : memref<8x256xf32, #tpu.memory_space<vmem>>, vector<8x256xf32>
    tpu.vector_store %arg1[%c0_2, %c0_3], %13 {strides = array<i32>} : memref<8x256xf32, #tpu.memory_space<vmem>>, vector<8x256xf32>,
    return
  }
}

</mosaic_0001>

<llo_original>
// kernel: positional_encoding_pallas.1
$region0: #{positional_encoding_pallas.1}
  #allocation0 [shape = 'u32[]', space=smem, size = 0x4, offset = 0x4, fixed_abs, tag = 'smem constant byte address 0x4 - core index']
  #allocation1 [shape = 'u32[144,128]{1,0:T(1,128)}', space=vmem, size = 0x12000, scoped, tag = 'internal scratch']
  %s0 = inlined_call_operand.vmem [shape: f32[8,1], index: 0, kind: input, shape index: {}]
  %s1 = inlined_call_operand.hbm [shape: f32[8,256], index: 1, kind: output, shape index: {}]
  %s2 = sld [smem:[#allocation0]]
  $region14: #{positional_encoding_pallas.1} parent=0
    _
  %s4 = ssub.s32 1, %s2
  %s5 = scalar_select 0, %s4, %s2
  $region1: #{positional_encoding_pallas.1} parent=0
    #allocation2 [shape = 'u8[8192]{0}', space=vmem, size = 0x2000, scoped, tag = 'output window, operand 0, single buffered']
    #allocation3 [shape = 's32[1]{0}', space=sflag, size = 0x4, scoped, tag = 'scoped memory for positional_encoding_pallas.1']
    %6 = vsyncpa [#allocation3], 0
    // Predicated region
    $region2: #{positional_encoding_pallas.1} parent=1 // pred_check
      _
    $region3: #{positional_encoding_pallas.1} parent=1 // pred_check_branch
      %8 = sbr.rel (0) target = $region5
    $region4: #{positional_encoding_pallas.1} parent=1 // pred_region
      _
    $region5: #{positional_encoding_pallas.1} parent=1 // pred_fallthru
      _
    %v9 = vlaneseq
    %v10 = vand.u32 %v9, 127
    %v11 = vcvt.s32.f32 %v10
    %v12 = vmul.f32 %v11, 0.0078125
    %v13 = vmul.f32 %v12, -9.2103405
    %v14 = vmul.f32 %v13, 1.442695
    %v15 = vpow.pop %v14
    %v16 = vld [vmem:[%s0] sm:$0xff]
    %18 = vset.pattern.permute.xlu0 0
    %19 = vperm.xlu0 %18, %v16
    %v20 = vpop.permute.xlu0 %19
    %v22 = vmul.f32 %v20, %v15
    %v23 = vand.u32 2147483647, %v22
    %vm24 = vcmp.le.f32.partialorder %v23, 0.7853982
    %vm25 = vcmp.lt.s32.totalorder %v22, 0
    %v26 = vand.u32 %v22, 2139095040
    %v27 = vshrl.u32 %v26, 23
    %v28 = vsub.s32 %v27, 127
    %v29 = vand.u32 2147483647, %v22
    %v30 = vand.u32 %v29, 8388607
    %v31 = vor.u32 %v30, 8388608
    %v32 = vsub.s32 0, %v31
    %v33 = vadd.s32 %v28, 1
    %vm34 = vcmp.gt.s32.totalorder %v33, 0
    %v35 = vsel %vm34, %v33, 0
    %v36 = vshrl.u32 %v35, 5
    %v37 = vand.u32 %v35, 31
    %v38 = vsub.s32 32, %v37
    %v39 = vshrl.u32 683565275, %v38
    %v40 = vshll.u32 683565275, %v37
    %v41 = vshrl.u32 2475754826, %v38
    %v42 = vor.u32 %v40, %v41
    %v43 = vshll.u32 2475754826, %v37
    %v44 = vshrl.u32 2131351028, %v38
    %v45 = vor.u32 %v43, %v44
    %v46 = vshll.u32 2131351028, %v37
    %v47 = vshrl.u32 2102212464, %v38
    %v48 = vor.u32 %v46, %v47
    %v49 = vshll.u32 2102212464, %v37
    %v50 = vshrl.u32 920167782, %v38
    %v51 = vor.u32 %v49, %v50
    %v52 = vshll.u32 920167782, %v37
    %v53 = vshrl.u32 1326507024, %v38
    %v54 = vor.u32 %v52, %v53
    %vm55 = vcmp.lt.s32.totalorder %v36, 1
    %vm56 = vcmp.lt.s32.totalorder %v36, 2
    %vm57 = vcmp.lt.s32.totalorder %v36, 3
    %vm58 = vcmp.lt.s32.totalorder %v36, 4
    %v59 = vsel %vm55, %v39, %v42
    %v60 = vsel %vm58, %v48, 2102212464
    %v61 = vsel %vm57, %v45, %v60
    %v62 = vsel %vm56, %v59, %v61
    %v63 = vsel %vm55, %v42, %v45
    %v64 = vsel %vm58, %v51, 920167782
    %v65 = vsel %vm57, %v48, %v64
    %v66 = vsel %vm56, %v63, %v65
    %v67 = vsel %vm55, %v45, %v48
    %v68 = vsel %vm58, %v54, 1326507024
    %v69 = vsel %vm57, %v51, %v68
    %v70 = vsel %vm56, %v67, %v69
    %v71 = vshll.u32 %v31, 8
    %v72 = vmul.u32.u64.compose %v71, %v70
    %v73 = vextract.low.u32 %v72
    %v74 = vextract.high.u32 %v72
    %v75 = vmul.u32.u64.compose %v71, %v66
    %v76 = vextract.low.u32 %v75
    %v77 = vextract.high.u32 %v75
    %v78 = vmul.u32 %v71, %v62
    %v79 = vadd.s32 %v74, %v76
    %vm80 = vc.u32 %v74, %v76
    %v81 = vadd.s32 %v77, 1
    %v82 = vsel %vm80, %v81, %v77
    %v83 = vadd.s32 %v78, %v82
    %v84 = vadd.s32 %v83, 536870912
    %v85 = vshrl.u32 %v84, 30
    %v86 = vshll.u32 %v85, 30
    %v87 = vsub.s32 %v83, %v86
    %vm88 = vcmp.lt.s32.totalorder %v87, 0
    %v89 = vsub.s32 0, %v87
    %v90 = vsel %vm88, %v89, %v87
    %v91 = vclz %v90
    %v92 = vsub.s32 %v91, 2
    %vm93 = vcmp.gt.s32.totalorder 0, %v92
    %v94 = vsel %vm93, 0, %v92
    %v95 = vsub.s32 32, %v94
    %v96 = vshll.u32 %v87, %v94
    %v97 = vshrl.u32 %v79, %v95
    %v98 = vor.u32 %v96, %v97
    %v99 = vsub.s32 4294967266, %v94
    %v100 = vadd.s32 %v99, 127
    %v101 = vshll.u32 %v100, 23
    %v102 = vor.u32 4788187, %v101
    %v103 = vand.u32 2147483647, %v102
    %v105 = vcvt.s32.f32 %v98
    %v106 = vmul.f32 %v105, %v103
    %v107 = vxor.u32 %v106, 2147483648
    %v108 = vsel %vm25, %v107, %v106
    %v109 = vsub.s32 4, %v85
    %v110 = vsel %vm25, %v109, %v85
    %v111 = vsel %vm24, %v22, %v108
    %v112 = vsel %vm24, 0, %v110
    %v113 = vcosq.f32.pop %v111
    %v114 = vsinq.f32.pop %v111
    %vm115 = vweird.f32 %v22
    %v116 = vadd.s32 %v112, 3
    %v117 = vand.u32 %v116, 3
    %vm118 = vcmp.lt.s32.totalorder %v117, 2
    %vm119 = vcmp.eq.s32.totalorder %v117, 0
    %v120 = vxor.u32 %v114, 2147483648
    %v121 = vsel %vm119, %v113, %v120
    %vm122 = vcmp.eq.s32.totalorder %v117, 2
    %v123 = vxor.u32 %v113, 2147483648
    %v124 = vsel %vm122, %v123, %v114
    %v125 = vsel %vm118, %v121, %v124
    %v126 = vsel %vm115, nan, %v125
    %v127 = vand.u32 2147483647, %v22
    %vm128 = vcmp.le.f32.partialorder %v127, 0.7853982
    %vm129 = vcmp.lt.s32.totalorder %v22, 0
    %v130 = vand.u32 %v22, 2139095040
    %v131 = vshrl.u32 %v130, 23
    %v132 = vsub.s32 %v131, 127
    %v133 = vand.u32 2147483647, %v22
    %v134 = vand.u32 %v133, 8388607
    %v135 = vor.u32 %v134, 8388608
    %v136 = vsub.s32 0, %v135
    %v137 = vadd.s32 %v132, 1
    %vm138 = vcmp.gt.s32.totalorder %v137, 0
    %v139 = vsel %vm138, %v137, 0
    %v140 = vshrl.u32 %v139, 5
    %v141 = vand.u32 %v139, 31
    %v142 = vsub.s32 32, %v141
    %v143 = vshrl.u32 683565275, %v142
    %v144 = vshll.u32 683565275, %v141
    %v145 = vshrl.u32 2475754826, %v142
    %v146 = vor.u32 %v144, %v145
    %v147 = vshll.u32 2475754826, %v141
    %v148 = vshrl.u32 2131351028, %v142
    %v149 = vor.u32 %v147, %v148
    %v150 = vshll.u32 2131351028, %v141
    %v151 = vshrl.u32 2102212464, %v142
    %v152 = vor.u32 %v150, %v151
    %v153 = vshll.u32 2102212464, %v141
    %v154 = vshrl.u32 920167782, %v142
    %v155 = vor.u32 %v153, %v154
    %v156 = vshll.u32 920167782, %v141
    %v157 = vshrl.u32 1326507024, %v142
    %v158 = vor.u32 %v156, %v157
    %vm159 = vcmp.lt.s32.totalorder %v140, 1
    %vm160 = vcmp.lt.s32.totalorder %v140, 2
    %vm161 = vcmp.lt.s32.totalorder %v140, 3
    %vm162 = vcmp.lt.s32.totalorder %v140, 4
    %v163 = vsel %vm159, %v143, %v146
    %v164 = vsel %vm162, %v152, 2102212464
    %v165 = vsel %vm161, %v149, %v164
    %v166 = vsel %vm160, %v163, %v165
    %v167 = vsel %vm159, %v146, %v149
    %v168 = vsel %vm162, %v155, 920167782
    %v169 = vsel %vm161, %v152, %v168
    %v170 = vsel %vm160, %v167, %v169
    %v171 = vsel %vm159, %v149, %v152
    %v172 = vsel %vm162, %v158, 1326507024
    %v173 = vsel %vm161, %v155, %v172
    %v174 = vsel %vm160, %v171, %v173
    %v175 = vshll.u32 %v135, 8
    %v176 = vmul.u32.u64.compose %v175, %v174
    %v177 = vextract.low.u32 %v176
    %v178 = vextract.high.u32 %v176
    %v179 = vmul.u32.u64.compose %v175, %v170
    %v180 = vextract.low.u32 %v179
    %v181 = vextract.high.u32 %v179
    %v182 = vmul.u32 %v175, %v166
    %v183 = vadd.s32 %v178, %v180
    %vm184 = vc.u32 %v178, %v180
    %v185 = vadd.s32 %v181, 1
    %v186 = vsel %vm184, %v185, %v181
    %v187 = vadd.s32 %v182, %v186
    %v188 = vadd.s32 %v187, 536870912
    %v189 = vshrl.u32 %v188, 30
    %v190 = vshll.u32 %v189, 30
    %v191 = vsub.s32 %v187, %v190
    %vm192 = vcmp.lt.s32.totalorder %v191, 0
    %v193 = vsub.s32 0, %v191
    %v194 = vsel %vm192, %v193, %v191
    %v195 = vclz %v194
    %v196 = vsub.s32 %v195, 2
    %vm197 = vcmp.gt.s32.totalorder 0, %v196
    %v198 = vsel %vm197, 0, %v196
    %v199 = vsub.s32 32, %v198
    %v200 = vshll.u32 %v191, %v198
    %v201 = vshrl.u32 %v183, %v199
    %v202 = vor.u32 %v200, %v201
    %v203 = vsub.s32 4294967266, %v198
    %v204 = vadd.s32 %v203, 127
    %v205 = vshll.u32 %v204, 23
    %v206 = vor.u32 4788187, %v205
    %v207 = vand.u32 2147483647, %v206
    %v209 = vcvt.s32.f32 %v202
    %v210 = vmul.f32 %v209, %v207
    %v211 = vxor.u32 %v210, 2147483648
    %v212 = vsel %vm129, %v211, %v210
    %v213 = vsub.s32 4, %v189
    %v214 = vsel %vm129, %v213, %v189
    %v215 = vsel %vm128, %v22, %v212
    %v216 = vsel %vm128, 0, %v214
    %v217 = vcosq.f32.pop %v215
    %v218 = vsinq.f32.pop %v215
    %vm219 = vweird.f32 %v22
    %v220 = vand.u32 %v216, 3
    %vm221 = vcmp.lt.s32.totalorder %v220, 2
    %vm222 = vcmp.eq.s32.totalorder %v220, 0
    %v223 = vxor.u32 %v218, 2147483648
    %v224 = vsel %vm222, %v217, %v223
    %vm225 = vcmp.eq.s32.totalorder %v220, 2
    %v226 = vxor.u32 %v217, 2147483648
    %v227 = vsel %vm225, %v226, %v218
    %v228 = vsel %vm221, %v224, %v227
    %v229 = vsel %vm219, nan, %v228
    %230 = vst [vmem:[#allocation2] sm:$0xff] %v126
    %231 = vst [vmem:[#allocation2 + $0x8] sm:$0xff] %v229
    // Predicated region
    $region6: #{positional_encoding_pallas.1} parent=1 // pred_check
      _
    $region7: #{positional_encoding_pallas.1} parent=1 // pred_check_branch
      %233 = sbr.rel (0) target = $region9
    $region8: #{positional_encoding_pallas.1} parent=1 // pred_region
      %s235 = ssub.s32 256, 256
      %236 = vsyncadd [#allocation3], %s235
      %s238 = sshll.u32 [#allocation2], 4
      %s239 = int_to_ptr.vmem [resolvable:$true] %s238
      %241 = dma.vmem_to_hbm [thread:$0]  %s239, 256, %s1, [#allocation3]
    $region9: #{positional_encoding_pallas.1} parent=1 // pred_fallthru
      _
    // Predicated region
    $region10: #{positional_encoding_pallas.1} parent=1 // pred_check
      _
    $region11: #{positional_encoding_pallas.1} parent=1 // pred_check_branch
      %243 = sbr.rel (0) target = $region13
    $region12: #{positional_encoding_pallas.1} parent=1 // pred_region
      %244 = dma.done [#allocation3], 256
    $region13: #{positional_encoding_pallas.1} parent=1 // pred_fallthru
      _
    %245 = vsyncpa [#allocation3], 1

</llo_original>
